<compile_context>
chip_gen: v6e
topology: v6e:2x2x1
jax: 0.10.0
libtpu: 0.0.40
codegen_flags: <defaults>
</compile_context>

<pallas_src>
import math
import functools

import jax
import jax.numpy as jnp
from jax.experimental import pallas as pl
from jax.experimental.pallas import tpu as pltpu


def _token_embedding_gather_kernel(tok_ref, emb_hbm, out_ref, buf, sem, *,
                                   scale, token_block, depth, vocab):
    # tok_ref : (N,) int32 in SMEM        (scalar-prefetched token ids)
    # emb_hbm : (V, E) float32 in HBM     (raw ref, manual DMA gather)
    # out_ref : (token_block, E) f32 VMEM output tile
    # buf     : (token_block, E) f32 VMEM gather destination (scratch)
    # sem     : (depth,) DMA semaphores   (rolling slots, `depth` in flight)
    base = pl.program_id(0) * token_block

    def _wait(slot, row):
        # Wait descriptor matches the (1, E) byte count / dst row of the copy
        # that was started on this slot.
        pltpu.make_async_copy(
            emb_hbm.at[pl.ds(0, 1), :],
            buf.at[pl.ds(row, 1), :],
            sem.at[slot],
        ).wait()

    @pl.loop(0, token_block)
    def _(t):
        slot = t % depth

        # Keep at most `depth` copies outstanding: before reusing a slot,
        # drain the copy issued `depth` iterations ago (row t - depth).
        @pl.when(t >= depth)
        def _():
            _wait(slot, t - depth)

        # Clamp ids like jnp.take (out-of-range ids read a valid row instead
        # of tripping the DMA bounds check).
        tok_id = jnp.clip(tok_ref[base + t], 0, vocab - 1)
        pltpu.make_async_copy(
            emb_hbm.at[pl.ds(tok_id, 1), :],   # one table row from HBM
            buf.at[pl.ds(t, 1), :],            # into row t of the VMEM tile
            sem.at[slot],
        ).start()

    # Drain the last `depth` outstanding copies (token_block % depth == 0, so
    # slot s still holds the copy for row token_block - depth + s).
    @pl.loop(0, depth)
    def _(s):
        _wait(s, token_block - depth + s)

    # Fused * sqrt(emb_size); E % 128 == 0 keeps this an unmasked, lane-dense
    # store into the pipelined output block.
    out_ref[...] = buf[...] * jnp.float32(scale)


def token_embedding(tokens, emb_table, *, token_block=256, dma_depth=8):
    """tokens: (B, S) integer array; emb_table: (V, E) float32.

    Returns (B, S, E) float32 == embedding(tokens) * sqrt(E).
    """
    B, S = tokens.shape
    V, E = emb_table.shape
    N = B * S

    token_block = min(token_block, N)
    assert N % token_block == 0, "B*S must be divisible by token_block"
    depth = min(dma_depth, token_block)
    assert token_block % depth == 0, "token_block must be a multiple of dma_depth"
    assert E % 128 == 0, "pad emb_size to a multiple of 128 for lane-dense stores"
    scale = math.sqrt(E)

    tok_flat = tokens.reshape(N).astype(jnp.int32)

    kernel = functools.partial(
        _token_embedding_gather_kernel,
        scale=scale, token_block=token_block, depth=depth, vocab=V)

    out2d = pl.pallas_call(
        kernel,
        out_shape=jax.ShapeDtypeStruct((N, E), emb_table.dtype),
        grid_spec=pltpu.PrefetchScalarGridSpec(
            num_scalar_prefetch=1,                 # token ids -> SMEM
            grid=(N // token_block,),
            in_specs=[
                # Embedding table stays in HBM; rows gathered by manual DMA.
                pl.BlockSpec(memory_space=pl.ANY),
            ],
            out_specs=pl.BlockSpec((token_block, E), lambda i, tok: (i, 0)),
            scratch_shapes=[
                pltpu.VMEM((token_block, E), emb_table.dtype),
                pltpu.SemaphoreType.DMA((depth,)),
            ],
        ),
        compiler_params=pltpu.CompilerParams(
            # Token-block axis is embarrassingly parallel (shards across the
            # two TensorCores on v7x; harmless elsewhere).
            dimension_semantics=("parallel",),
        ),
    )(tok_flat, emb_table)

    return out2d.reshape(B, S, E)


if __name__ == "__main__":
    # Small, module-consistent shapes.
    vocab_size = 512
    emb_size = 128       # multiple of 128 -> lane-dense output stores
    batch, seq = 2, 8

    key = jax.random.PRNGKey(0)
    k_emb, k_tok = jax.random.split(key)

    # Deterministic synthetic parameters (nn.Embedding weight analogue).
    emb_table = (jax.random.normal(k_emb, (vocab_size, emb_size), dtype=jnp.float32)
                 * 0.02)
    tokens = jax.random.randint(k_tok, (batch, seq), 0, vocab_size, dtype=jnp.int32)

    out = token_embedding(tokens, emb_table)
    out = jax.block_until_ready(out)

    # Pure-JAX reference: embedding lookup * sqrt(emb_size)
    ref = jnp.take(emb_table, tokens, axis=0) * math.sqrt(emb_size)
    assert out.shape == (batch, seq, emb_size)
    assert out.dtype == jnp.float32
    assert jnp.allclose(out, ref, atol=1e-5, rtol=1e-5)

    print("KERNEL_OK")
</pallas_src>

<mosaic_0001>
module attributes {stable_mosaic.version = 11 : i64} {
  func.func @_token_embedding_gather_kernel(%arg0: i32, %arg1: memref<16xi32, #tpu.memory_space<smem>>, %arg2: memref<512x128xf32, #tpu.memory_space<any>>, %arg3: memref<16x128xf32, #tpu.memory_space<vmem>>, %arg4: memref<16x128xf32, #tpu.memory_space<vmem>>, %arg5: memref<8x!tpu.dma_semaphore, #tpu.memory_space<semaphore_mem>>) attributes {dimension_semantics = [#tpu.dimension_semantics<parallel>], iteration_bounds = array<i64: 1>, scalar_prefetch = 1 : i64, scratch_operands = 2 : i64, tpu.core_type = #tpu.core_type<tc>, window_params = [{}, {transform_indices = @transform_1, window_bounds = array<i64: 16, 128>}]} {
    %c16_i32 = arith.constant 16 : i32
    %0 = arith.muli %arg0, %c16_i32 : i32
    %c0_i32 = arith.constant 0 : i32
    %c16_i32_0 = arith.constant 16 : i32
    %1 = arith.addi %c0_i32, %c16_i32_0 : i32
    %c1_i32 = arith.constant 1 : i32
    scf.for %arg6 = %c0_i32 to %1 step %c1_i32  : i32 {
      %c1_i32_8 = arith.constant 1 : i32
      %7 = arith.muli %arg6, %c1_i32_8 : i32
      %c0_i32_9 = arith.constant 0 : i32
      %8 = arith.addi %c0_i32_9, %7 : i32
      %c8_i32_10 = arith.constant 8 : i32
      %c0_i32_11 = arith.constant 0 : i32
      %9 = arith.cmpi eq, %c8_i32_10, %c0_i32_11 : i32
      %c1_i32_12 = arith.constant 1 : i32
      %10 = arith.select %9, %c1_i32_12, %c8_i32_10 : i32
      %11 = arith.remsi %8, %10 : i32
      %c0_i32_13 = arith.constant 0 : i32
      %12 = arith.cmpi ne, %11, %c0_i32_13 : i32
      %c0_i32_14 = arith.constant 0 : i32
      %13 = arith.cmpi slt, %11, %c0_i32_14 : i32
      %c0_i32_15 = arith.constant 0 : i32
      %14 = arith.cmpi slt, %10, %c0_i32_15 : i32
      %15 = arith.xori %13, %14 : i1
      %16 = arith.andi %15, %12 : i1
      %17 = arith.addi %11, %10 : i32
      %18 = arith.select %16, %17, %11 : i32
      %c8_i32_16 = arith.constant 8 : i32
      %19 = arith.cmpi sge, %8, %c8_i32_16 : i32
      %20 = arith.extui %19 : i1 to i32
      %c0_i32_17 = arith.constant 0 : i32
      %21 = arith.cmpi ne, %20, %c0_i32_17 : i32
      scf.if %21 {
        %c8_i32_21 = arith.constant 8 : i32
        %31 = arith.subi %8, %c8_i32_21 : i32
        %c0_i32_22 = arith.constant 0 : i32
        %c0_i32_23 = arith.constant 0 : i32
        %32 = tpu.memref_slice %arg2[%c0_i32_22, %c0_i32_23] : memref<512x128xf32, #tpu.memory_space<any>> -> memref<1x128xf32, #tpu.memory_space<any>>
        %c0_i32_24 = arith.constant 0 : i32
        %33 = tpu.memref_slice %arg4[%31, %c0_i32_24] : memref<16x128xf32, #tpu.memory_space<vmem>> -> memref<1x128xf32, #tpu.memory_space<vmem>>
        %34 = tpu.memref_slice %arg5[%18] : memref<8x!tpu.dma_semaphore, #tpu.memory_space<semaphore_mem>> -> memref<1x!tpu.dma_semaphore, #tpu.memory_space<semaphore_mem>>
        %35 = tpu.memref_squeeze %34 : memref<1x!tpu.dma_semaphore, #tpu.memory_space<semaphore_mem>> -> memref<!tpu.dma_semaphore, #tpu.memory_space<semaphore_mem>>
        tpu.wait_dma2 semaphore(%35 : memref<!tpu.dma_semaphore, #tpu.memory_space<semaphore_mem>>) src(%32 : memref<1x128xf32, #tpu.memory_space<any>>) dst(%33 : memref<1x128xf32, #tpu.memory_space<vmem>>)
      } else {
      }
      %22 = arith.addi %0, %8 : i32
      %23 = arith.index_cast %22 : i32 to index
      %24 = memref.load %arg1[%23] : memref<16xi32, #tpu.memory_space<smem>>
      %c0_i32_18 = arith.constant 0 : i32
      %c511_i32 = arith.constant 511 : i32
      %25 = arith.maxsi %c0_i32_18, %24 : i32
      %26 = arith.minsi %c511_i32, %25 : i32
      %c0_i32_19 = arith.constant 0 : i32
      %27 = tpu.memref_slice %arg2[%26, %c0_i32_19] : memref<512x128xf32, #tpu.memory_space<any>> -> memref<1x128xf32, #tpu.memory_space<any>>
      %c0_i32_20 = arith.constant 0 : i32
      %28 = tpu.memref_slice %arg4[%8, %c0_i32_20] : memref<16x128xf32, #tpu.memory_space<vmem>> -> memref<1x128xf32, #tpu.memory_space<vmem>>
      %29 = tpu.memref_slice %arg5[%18] : memref<8x!tpu.dma_semaphore, #tpu.memory_space<semaphore_mem>> -> memref<1x!tpu.dma_semaphore, #tpu.memory_space<semaphore_mem>>
      %30 = tpu.memref_squeeze %29 : memref<1x!tpu.dma_semaphore, #tpu.memory_space<semaphore_mem>> -> memref<!tpu.dma_semaphore, #tpu.memory_space<semaphore_mem>>
      tpu.enqueue_dma source(%27 : memref<1x128xf32, #tpu.memory_space<any>>) target(%28 : memref<1x128xf32, #tpu.memory_space<vmem>>) target_semaphore(%30 : memref<!tpu.dma_semaphore, #tpu.memory_space<semaphore_mem>>)
    }
    %c16_i32_1 = arith.constant 16 : i32
    %c0_i32_2 = arith.constant 0 : i32
    %c8_i32 = arith.constant 8 : i32
    %2 = arith.addi %c0_i32_2, %c8_i32 : i32
    %c1_i32_3 = arith.constant 1 : i32
    scf.for %arg6 = %c0_i32_2 to %2 step %c1_i32_3  : i32 {
      %c1_i32_8 = arith.constant 1 : i32
      %7 = arith.muli %arg6, %c1_i32_8 : i32
      %c0_i32_9 = arith.constant 0 : i32
      %8 = arith.addi %c0_i32_9, %7 : i32
      %c8_i32_10 = arith.constant 8 : i32
      %9 = arith.addi %c8_i32_10, %8 : i32
      %c0_i32_11 = arith.constant 0 : i32
      %c0_i32_12 = arith.constant 0 : i32
      %10 = tpu.memref_slice %arg2[%c0_i32_11, %c0_i32_12] : memref<512x128xf32, #tpu.memory_space<any>> -> memref<1x128xf32, #tpu.memory_space<any>>
      %c0_i32_13 = arith.constant 0 : i32
      %11 = tpu.memref_slice %arg4[%9, %c0_i32_13] : memref<16x128xf32, #tpu.memory_space<vmem>> -> memref<1x128xf32, #tpu.memory_space<vmem>>
      %12 = tpu.memref_slice %arg5[%8] : memref<8x!tpu.dma_semaphore, #tpu.memory_space<semaphore_mem>> -> memref<1x!tpu.dma_semaphore, #tpu.memory_space<semaphore_mem>>
      %13 = tpu.memref_squeeze %12 : memref<1x!tpu.dma_semaphore, #tpu.memory_space<semaphore_mem>> -> memref<!tpu.dma_semaphore, #tpu.memory_space<semaphore_mem>>
      tpu.wait_dma2 semaphore(%13 : memref<!tpu.dma_semaphore, #tpu.memory_space<semaphore_mem>>) src(%10 : memref<1x128xf32, #tpu.memory_space<any>>) dst(%11 : memref<1x128xf32, #tpu.memory_space<vmem>>)
    }
    %c8_i32_4 = arith.constant 8 : i32
    %c0 = arith.constant 0 : index
    %c0_5 = arith.constant 0 : index
    %3 = vector.load %arg4[%c0, %c0_5] : memref<16x128xf32, #tpu.memory_space<vmem>>, vector<16x128xf32>
    %cst = arith.constant 11.3137083 : f32
    %4 = vector.broadcast %cst : f32 to vector<16x128xf32>
    %5 = arith.mulf %3, %4 : vector<16x128xf32>
    %c0_6 = arith.constant 0 : index
    %c0_7 = arith.constant 0 : index
    %6 = vector.load %arg3[%c0_6, %c0_7] : memref<16x128xf32, #tpu.memory_space<vmem>>, vector<16x128xf32>
    tpu.vector_store %arg3[%c0_6, %c0_7], %5 {strides = array<i32>} : memref<16x128xf32, #tpu.memory_space<vmem>>, vector<16x128xf32>,
    return
  }
  func.func @transform_1(%arg0: i32, %arg1: memref<16xi32, #tpu.memory_space<smem>>) -> (i32, i32) {
    %c0_i32 = arith.constant 0 : i32
    %c0_i32_0 = arith.constant 0 : i32
    return %arg0, %c0_i32 : i32, i32
  }
}

</mosaic_0001>

<llo_original>
// kernel: tpu_custom_call.1
$region0: #{tpu_custom_call.1}
  #allocation0 [shape = 'u32[]', space=smem, size = 0x4, offset = 0x4, fixed_abs, tag = 'smem constant byte address 0x4 - core index']
  #allocation1 [shape = 'u32[144,128]{1,0:T(1,128)}', space=vmem, size = 0x12000, scoped, tag = 'internal scratch']
  #allocation2 [shape = 'f32[16,128]{1,0:T(8,128)}', space=vmem, size = 0x2000, scoped, tag = 'scratch operand']
  #allocation3 [shape = 's32[8]{0}', space=sflag, size = 0x20, scoped, tag = 'scratch operand']
  #allocation4 [shape = 's32[1]{0}', space=sflag, size = 0x4, scoped, tag = 'scoped memory for tpu_custom_call.1']
  #allocation5 [shape = 'u8[512]{0}', space=smem, size = 0x200, scoped, tag = 'prefetched SMEM operand 0']
  #allocation8 [shape = 's32[]', space=sflag, size = 0x4, offset = 0, fixed_abs, tag = 'sflag constant byte address 0x0 - dummy sync flag']
  #allocation9 [shape = 's32[]', space=sflag, size = 0x4, offset = 0, fixed_abs, tag = 'sflag constant byte address 0x0 - dummy sync flag']
  #allocation10 [shape = 'u32[]', space=smem, size = 0x4, offset = 0x44, fixed_abs, tag = 'smem constant byte address 0x44 - assertion arg 0']
  #allocation11 [shape = 'u32[]', space=smem, size = 0x4, offset = 0x48, fixed_abs, tag = 'smem constant byte address 0x48 - assertion arg 1']
  %s0 = inlined_call_operand.hbm [shape: s32[16], index: 0, kind: input, shape index: {}]
  %s1 = inlined_call_operand.hbm [shape: f32[512,128], index: 1, kind: input, shape index: {}]
  %s2 = inlined_call_operand.hbm [shape: f32[16,128], index: 2, kind: output, shape index: {}]
  %s3 = sld [smem:[#allocation0]]
  $region32: #{tpu_custom_call.1} parent=0
    _
  %s5 = ssub.s32 1, %s3
  %s6 = scalar_select 0, %s5, %s3
  %8 = dma.hbm_to_smem %s0, 16, [#allocation5], [#allocation4]
  %9 = dma.done [#allocation4], 16
  %10 = sfence
  $region1: #{tpu_custom_call.1} parent=0
    #allocation6 [shape = 'u8[8192]{0}', space=vmem, size = 0x2000, scoped, tag = 'output window, operand 0, single buffered']
    #allocation7 [shape = 's32[1]{0}', space=sflag, size = 0x4, scoped, tag = 'scoped memory for tpu_custom_call.1']
    %11 = vsyncpa [#allocation7], 0
    %s12 = smul.u32 0, 16
    loop: start=0, step=1, limit=16
    $region2: #{tpu_custom_call.1} parent=1 // loop_pre_header
      _
    $region3: #{tpu_custom_call.1} parent=1 // loop_header
      %s14 = sphi 0, %s18
      %p15 = scmp.ge.s32.totalorder %s14, 16
    $region4: #{tpu_custom_call.1} parent=1 // loop_header_branch
      %17 = sbr.rel (%p15) target = $region8
    $region5: #{tpu_custom_call.1} parent=1 // loop_body
      %p19 = scmp.lt.s32.totalorder %s14, 0
      %s20 = ssub.s32 0, %s14
      %s21 = scalar_select %p19, %s20, %s14
      %s22 = sand.u32 %s21, 7
      %s23 = ssub.s32 0, %s22
      %s24 = scalar_select %p19, %s23, %s22
      %p25 = scmp.ne.s32.totalorder %s24, 0
      %p26 = scmp.lt.s32.totalorder %s24, 0
      %p27 = pnand %p26, %p25
      %p28 = pneg %p27
      %s29 = sadd.s32 %s24, 8
      %s30 = scalar_select %p28, %s29, %s24
      %p31 = scmp.ge.s32.totalorder %s14, 8
      // Predicated region
      $region9: #{tpu_custom_call.1} parent=5 // pred_check
        %p32 = pneg %p31
      $region10: #{tpu_custom_call.1} parent=5 // pred_check_branch
        %34 = sbr.rel (%p32) target = $region12
      $region11: #{tpu_custom_call.1} parent=5 // pred_region
        %s35 = scalar_lea.sflag [#allocation3], %s30
        %s36 = smul.u32 1, 1
        %s37 = sshll.u32 %s36, 4
        %38 = dma.done %s35, %s37
      $region12: #{tpu_custom_call.1} parent=5 // pred_fallthru
        _
      %s39 = sadd.s32 %s12, %s14
      %s40 = sld [smem:[#allocation5 + %s39]]
      %p41 = scmp.gt.s32.totalorder %s40, 0
      %s42 = scalar_select %p41, %s40, 0
      %p43 = scmp.lt.s32.totalorder %s42, 511
      %s44 = scalar_select %p43, %s42, 511
      %s45 = smul.addr %s44, 16
      %s46 = scalar_lea.hbm %s1, %s45
      %s47 = scalar_lea.vmem [#allocation2], %s14
      %s48 = scalar_lea.sflag [#allocation3], %s30
      // Predicated region
      $region13: #{tpu_custom_call.1} parent=5 // pred_check
        _
      $region14: #{tpu_custom_call.1} parent=5 // pred_check_branch
        %50 = sbr.rel target = $region16
      $region15: #{tpu_custom_call.1} parent=5 // pred_region
        %51 = sst [smem:[#allocation10]] [#allocation9]
        %52 = sst [smem:[#allocation11]] [#allocation8]
      $region16: #{tpu_custom_call.1} parent=5 // pred_fallthru
        _
      %54 = shalt.err (0)
      %s56 = sshll.u32 %s47, 4
      %s57 = int_to_ptr.vmem [resolvable:$true] %s56
      %59 = dma.hbm_to_vmem [thread:$0]  %s46, 16, %s57, %s48
    $region6: #{tpu_custom_call.1} parent=1 // loop_footer
      %s18 = sadd.s32 1, %s14
    $region7: #{tpu_custom_call.1} parent=1 // loop_footer_branch
      %13 = sbr.rel target = $region3
    $region8: #{tpu_custom_call.1} parent=1 // loop_exit
      _
    loop: start=0, step=1, limit=8
    $region17: #{tpu_custom_call.1} parent=1 // loop_pre_header
      _
    $region18: #{tpu_custom_call.1} parent=1 // loop_header
      %s61 = sphi 0, %s65
      %p62 = scmp.ge.s32.totalorder %s61, 8
    $region19: #{tpu_custom_call.1} parent=1 // loop_header_branch
      %64 = sbr.rel (%p62) target = $region23
    $region20: #{tpu_custom_call.1} parent=1 // loop_body
      %s66 = scalar_lea.sflag [#allocation3], %s61
      %s67 = smul.u32 1, 1
      %s68 = sshll.u32 %s67, 4
      %69 = dma.done %s66, %s68
    $region21: #{tpu_custom_call.1} parent=1 // loop_footer
      %s65 = sadd.s32 1, %s61
    $region22: #{tpu_custom_call.1} parent=1 // loop_footer_branch
      %60 = sbr.rel target = $region18
    $region23: #{tpu_custom_call.1} parent=1 // loop_exit
      _
    %v70 = vld [vmem:[#allocation2] sm:$0xff]
    %v71 = vld [vmem:[#allocation2 + $0x8] sm:$0xff]
    %v72 = vmul.f32 %v70, 11.313708
    %v73 = vmul.f32 %v71, 11.313708
    %74 = vst [vmem:[#allocation6] sm:$0xff] %v72
    %75 = vst [vmem:[#allocation6 + $0x8] sm:$0xff] %v73
    // Predicated region
    $region24: #{tpu_custom_call.1} parent=1 // pred_check
      _
    $region25: #{tpu_custom_call.1} parent=1 // pred_check_branch
      %77 = sbr.rel (0) target = $region27
    $region26: #{tpu_custom_call.1} parent=1 // pred_region
      %s79 = ssub.s32 256, 256
      %80 = vsyncadd [#allocation7], %s79
      %s81 = sshll.u32 [#allocation6], 4
      %s82 = int_to_ptr.vmem [resolvable:$true] %s81
      %87 = dma.vmem_to_hbm [thread:$0]  %s82, 256, %s2, [#allocation7], 128, 128, 8
    $region27: #{tpu_custom_call.1} parent=1 // pred_fallthru
      _
    // Predicated region
    $region28: #{tpu_custom_call.1} parent=1 // pred_check
      _
    $region29: #{tpu_custom_call.1} parent=1 // pred_check_branch
      %89 = sbr.rel (0) target = $region31
    $region30: #{tpu_custom_call.1} parent=1 // pred_region
      %90 = dma.done [#allocation7], 256
    $region31: #{tpu_custom_call.1} parent=1 // pred_fallthru
      _
    %91 = vsyncpa [#allocation7], 1
  %92 = vsyncmov [#allocation3]
  %s93 = vpop.sfrf %92
  %p94 = scmp.eq.s32.totalorder %s93, 0
  %p95 = pneg %p94
  %97 = shalt.err (%p95)
  %s98 = scalar_lea.sflag [#allocation3], 1
  %99 = vsyncmov %s98
  %s100 = vpop.sfrf %99
  %p101 = scmp.eq.s32.totalorder %s100, 0
  %p102 = pneg %p101
  %104 = shalt.err (%p102)
  %s105 = scalar_lea.sflag [#allocation3], 2
  %106 = vsyncmov %s105
  %s107 = vpop.sfrf %106
  %p108 = scmp.eq.s32.totalorder %s107, 0
  %p109 = pneg %p108
  %111 = shalt.err (%p109)
  %s112 = scalar_lea.sflag [#allocation3], 3
  %113 = vsyncmov %s112
  %s114 = vpop.sfrf %113
  %p115 = scmp.eq.s32.totalorder %s114, 0
  %p116 = pneg %p115
  %118 = shalt.err (%p116)
  %s119 = scalar_lea.sflag [#allocation3], 4
  %120 = vsyncmov %s119
  %s121 = vpop.sfrf %120
  %p122 = scmp.eq.s32.totalorder %s121, 0
  %p123 = pneg %p122
  %125 = shalt.err (%p123)
  %s126 = scalar_lea.sflag [#allocation3], 5
  %127 = vsyncmov %s126
  %s128 = vpop.sfrf %127
  %p129 = scmp.eq.s32.totalorder %s128, 0
  %p130 = pneg %p129
  %132 = shalt.err (%p130)
  %s133 = scalar_lea.sflag [#allocation3], 6
  %134 = vsyncmov %s133
  %s135 = vpop.sfrf %134
  %p136 = scmp.eq.s32.totalorder %s135, 0
  %p137 = pneg %p136
  %139 = shalt.err (%p137)
  %s140 = scalar_lea.sflag [#allocation3], 7
  %141 = vsyncmov %s140
  %s142 = vpop.sfrf %141
  %p143 = scmp.eq.s32.totalorder %s142, 0
  %p144 = pneg %p143
  %146 = shalt.err (%p144)

</llo_original>
